<compile_context>
chip_gen: v7x
topology: tpu7x:2x2x1
jax: 0.10.0
libtpu: 0.0.40
codegen_flags: <defaults>
</compile_context>

<pallas_src>
import math

import jax
import jax.numpy as jnp
from jax.experimental import pallas as pl
from jax.experimental.pallas import tpu as pltpu

_HALF_PI = float(math.pi / 2.0)
_TWO_PI = float(2.0 * math.pi)


def _periodic_kernel(x_ref, pw_ref, ph_ref, o_ref):
    # x_ref : (TILE_N, 1)        f32
    # pw_ref: (1, 2*C_pad)       f32  -- [2*pi*params | 2*pi*params]
    # ph_ref: (1, 2*C_pad)       f32  -- [0 ... 0 | pi/2 ... pi/2]
    # o_ref : (TILE_N, 2*C_pad)  f32  -- sin in lanes [0, C_pad), cos in [C_pad, 2*C_pad)
    arg = x_ref[...] * pw_ref[...] + ph_ref[...]   # VPU broadcast mul + add
    o_ref[...] = jnp.sin(arg)                      # single EUP stream, lane-dense store


def _round_up(v: int, m: int) -> int:
    return ((v + m - 1) // m) * m


def periodic_activation(x: jax.Array, params: jax.Array) -> jax.Array:
    """x: (..., 1), params: (num_coefs,) -> (..., 2*num_coefs)."""
    assert x.shape[-1] == 1
    num_coefs = params.shape[0]
    lead_shape = x.shape[:-1]
    n = 1
    for d in lead_shape:
        n *= d
    n = max(n, 1)

    # Pad coefficient dim so 2*c_pad is a multiple of 128 (lane-dense output).
    c_pad = _round_up(max(num_coefs, 1), 64)
    width = 2 * c_pad

    # Fold 2*pi into the (tiny) parameter row once in the wrapper; duplicate it
    # for the sin half and the cos half, and build the matching phase row.
    p = params.astype(jnp.float32) * jnp.float32(_TWO_PI)
    if c_pad != num_coefs:
        p = jnp.pad(p, (0, c_pad - num_coefs))
    pw = jnp.concatenate([p, p]).reshape(1, width)
    ph = jnp.concatenate(
        [jnp.zeros((c_pad,), jnp.float32),
         jnp.full((c_pad,), _HALF_PI, jnp.float32)]
    ).reshape(1, width)

    # Tile sizing: per double-buffered step
    #   x tile  (TILE_N, 1)  -> lane-padded to 128 lanes in VMEM: TILE_N*128*4 B
    #   out tile(TILE_N, 2*C_pad):                               TILE_N*width*4 B
    # TILE_N=2048, width=128 -> ~4 MiB total: safe on v5e/v6e/v7x VMEM budgets.
    tile_n = min(2048, _round_up(n, 8))
    n_pad = _round_up(n, tile_n)

    x2d = x.reshape(n, 1).astype(jnp.float32)
    if n_pad != n:
        x2d = jnp.pad(x2d, ((0, n_pad - n), (0, 0)))

    grid = (n_pad // tile_n,)

    cost = pl.CostEstimate(
        flops=2 * n_pad * width,
        transcendentals=n_pad * width,
        bytes_accessed=4 * (n_pad * (1 + width) + 2 * width),
    )

    out = pl.pallas_call(
        _periodic_kernel,
        out_shape=jax.ShapeDtypeStruct((n_pad, width), jnp.float32),
        grid=grid,
        in_specs=[
            pl.BlockSpec((tile_n, 1), lambda i: (i, 0)),
            pl.BlockSpec((1, width), lambda i: (0, 0)),
            pl.BlockSpec((1, width), lambda i: (0, 0)),
        ],
        out_specs=pl.BlockSpec((tile_n, width), lambda i: (i, 0)),
        compiler_params=pltpu.CompilerParams(
            dimension_semantics=("parallel",),
        ),
        cost_estimate=cost,
    )(x2d, pw, ph)

    # Strip row padding; if C was padded, re-pack [sin | cos] contiguously.
    out = out[:n]
    if c_pad != num_coefs:
        out = jnp.concatenate(
            [out[:, :num_coefs], out[:, c_pad:c_pad + num_coefs]], axis=-1
        )

    return out.reshape(*lead_shape, 2 * num_coefs)


def _reference(x: jax.Array, params: jax.Array) -> jax.Array:
    x_ = x * params * _TWO_PI
    return jnp.concatenate([jnp.sin(x_), jnp.cos(x_)], axis=-1)


if __name__ == "__main__":
    key = jax.random.PRNGKey(0)
    k_param, k_x = jax.random.split(key)

    num_coefs = 64
    sigma = 0.5

    # Deterministic parameter init (mirrors torch.randn(num_coefs) * sigma).
    params = jax.random.normal(k_param, (num_coefs,), dtype=jnp.float32) * sigma

    # Small example input: batch=2, seq=8, feature dim = 1.
    x = jax.random.normal(k_x, (2, 8, 1), dtype=jnp.float32)

    out = periodic_activation(x, params)
    out = jax.block_until_ready(out)

    ref = _reference(x, params)
    assert out.shape == (2, 8, 2 * num_coefs), out.shape
    # cos computed as sin(t + pi/2): exact up to a few ULPs vs jnp.cos.
    assert jnp.allclose(out, ref, atol=2e-5, rtol=1e-5), "mismatch vs reference"

    print("KERNEL_OK")
</pallas_src>

<mosaic_0001>
module attributes {stable_mosaic.version = 11 : i64} {
  func.func @_periodic_kernel(%arg0: i32, %arg1: memref<16x1xf32, #tpu.memory_space<vmem>>, %arg2: memref<1x128xf32, #tpu.memory_space<vmem>>, %arg3: memref<1x128xf32, #tpu.memory_space<vmem>>, %arg4: memref<16x128xf32, #tpu.memory_space<vmem>>) attributes {dimension_semantics = [#tpu.dimension_semantics<parallel>], iteration_bounds = array<i64: 1>, scalar_prefetch = 0 : i64, scratch_operands = 0 : i64, tpu.core_type = #tpu.core_type<tc>, window_params = [{transform_indices = @transform_0, window_bounds = array<i64: 16, 1>}, {pipeline_mode = #tpu.pipeline_mode<synchronous>, transform_indices = @transform_1, window_bounds = array<i64: 1, 128>}, {pipeline_mode = #tpu.pipeline_mode<synchronous>, transform_indices = @transform_2, window_bounds = array<i64: 1, 128>}, {transform_indices = @transform_3, window_bounds = array<i64: 16, 128>}]} {
    %c0 = arith.constant 0 : index
    %c0_0 = arith.constant 0 : index
    %0 = vector.load %arg1[%c0, %c0_0] : memref<16x1xf32, #tpu.memory_space<vmem>>, vector<16x1xf32>
    %c0_1 = arith.constant 0 : index
    %c0_2 = arith.constant 0 : index
    %1 = vector.load %arg2[%c0_1, %c0_2] : memref<1x128xf32, #tpu.memory_space<vmem>>, vector<1x128xf32>
    %2 = vector.broadcast %0 : vector<16x1xf32> to vector<16x128xf32>
    %3 = vector.broadcast %1 : vector<1x128xf32> to vector<16x128xf32>
    %4 = arith.mulf %2, %3 : vector<16x128xf32>
    %c0_3 = arith.constant 0 : index
    %c0_4 = arith.constant 0 : index
    %5 = vector.load %arg3[%c0_3, %c0_4] : memref<1x128xf32, #tpu.memory_space<vmem>>, vector<1x128xf32>
    %6 = vector.broadcast %5 : vector<1x128xf32> to vector<16x128xf32>
    %7 = arith.addf %4, %6 : vector<16x128xf32>
    %8 = math.sin %7 : vector<16x128xf32>
    %c0_5 = arith.constant 0 : index
    %c0_6 = arith.constant 0 : index
    %9 = vector.load %arg4[%c0_5, %c0_6] : memref<16x128xf32, #tpu.memory_space<vmem>>, vector<16x128xf32>
    tpu.vector_store %arg4[%c0_5, %c0_6], %8 {strides = array<i32>} : memref<16x128xf32, #tpu.memory_space<vmem>>, vector<16x128xf32>,
    return
  }
  func.func @transform_0(%arg0: i32) -> (i32, i32) {
    %c0_i32 = arith.constant 0 : i32
    %c0_i32_0 = arith.constant 0 : i32
    return %arg0, %c0_i32 : i32, i32
  }
  func.func @transform_1(%arg0: i32) -> (i32, i32) {
    %c0_i32 = arith.constant 0 : i32
    %c0_i32_0 = arith.constant 0 : i32
    %c0_i32_1 = arith.constant 0 : i32
    return %c0_i32, %c0_i32_0 : i32, i32
  }
  func.func @transform_2(%arg0: i32) -> (i32, i32) {
    %c0_i32 = arith.constant 0 : i32
    %c0_i32_0 = arith.constant 0 : i32
    %c0_i32_1 = arith.constant 0 : i32
    return %c0_i32, %c0_i32_0 : i32, i32
  }
  func.func @transform_3(%arg0: i32) -> (i32, i32) {
    %c0_i32 = arith.constant 0 : i32
    %c0_i32_0 = arith.constant 0 : i32
    return %arg0, %c0_i32 : i32, i32
  }
}

</mosaic_0001>

<llo_original>
// kernel: tpu_custom_call.1
$region0: #{tpu_custom_call.1}
  #allocation0 [shape = 'u32[]', space=smem, size = 0x4, offset = 0x4, fixed_abs, tag = 'smem constant byte address 0x4 - core index']
  #allocation1 [shape = 'u32[144,128]{1,0:T(1,128)}', space=vmem, size = 0x12000, scoped, tag = 'internal scratch']
  %s0 = inlined_call_operand.vmem [shape: f32[16,1], index: 0, kind: input, shape index: {}]
  %s1 = inlined_call_operand.vmem [shape: f32[1,128], index: 1, kind: input, shape index: {}]
  %s2 = inlined_call_operand.vmem [shape: f32[1,128], index: 2, kind: input, shape index: {}]
  %s3 = inlined_call_operand.hbm [shape: f32[16,128], index: 3, kind: output, shape index: {}]
  %s4 = sld [smem:[#allocation0]]
  $region22: #{tpu_custom_call.1} parent=0
    _
  %s6 = ssub.s32 1, %s4
  %s7 = scalar_select 0, %s6, %s4
  $region1: #{tpu_custom_call.1} parent=0
    #allocation2 [shape = 'u8[8192]{0}', space=vmem, size = 0x2000, scoped, tag = 'output window, operand 0, single buffered']
    #allocation3 [shape = 's32[1]{0}', space=sflag, size = 0x4, scoped, tag = 'scoped memory for tpu_custom_call.1']
    %8 = vsyncpa [#allocation3], 0
    // Predicated region
    $region2: #{tpu_custom_call.1} parent=1 // pred_check
      _
    $region3: #{tpu_custom_call.1} parent=1 // pred_check_branch
      %10 = sbr.rel (0) target = $region5
    $region4: #{tpu_custom_call.1} parent=1 // pred_region
      _
    $region5: #{tpu_custom_call.1} parent=1 // pred_fallthru
      _
    // Predicated region
    $region6: #{tpu_custom_call.1} parent=1 // pred_check
      _
    $region7: #{tpu_custom_call.1} parent=1 // pred_check_branch
      %12 = sbr.rel (0) target = $region9
    $region8: #{tpu_custom_call.1} parent=1 // pred_region
      _
    $region9: #{tpu_custom_call.1} parent=1 // pred_fallthru
      _
    // Predicated region
    $region10: #{tpu_custom_call.1} parent=1 // pred_check
      _
    $region11: #{tpu_custom_call.1} parent=1 // pred_check_branch
      %14 = sbr.rel (0) target = $region13
    $region12: #{tpu_custom_call.1} parent=1 // pred_region
      _
    $region13: #{tpu_custom_call.1} parent=1 // pred_fallthru
      _
    %v15 = vld [vmem:[%s0] sm:$0xff]
    %v16 = vld [vmem:[%s0 + $0x8] sm:$0xff]
    %v17 = vld [vmem:[%s1] sm:$0x1]
    %19 = vset.pattern.permute.xlu0 0
    %20 = vperm.xlu0 %19, %v15
    %v21 = vpop.permute.xlu0 %20
    %24 = vset.pattern.permute.xlu0 0
    %25 = vperm.xlu0 %24, %v16
    %v26 = vpop.permute.xlu0 %25
    %v29 = vlaneseq
    %v30 = vshrl.u32 %v29, 7
    %v31 = vsub.s32 0, %v30
    %v32 = vrot.slane %v17, %v31
    %v34 = vmul.f32 %v21, %v32
    %v35 = vmul.f32 %v26, %v32
    %v36 = vld [vmem:[%s2] sm:$0x1]
    %v38 = vlaneseq
    %v39 = vshrl.u32 %v38, 7
    %v40 = vsub.s32 0, %v39
    %v41 = vrot.slane %v36, %v40
    %v43 = vadd.f32 %v34, %v41
    %v44 = vadd.f32 %v35, %v41
    %v45 = vand.u32 2147483647, %v43
    %vm46 = vcmp.le.f32.partialorder %v45, 0.7853982
    %vm47 = vcmp.lt.s32.totalorder %v43, 0
    %v48 = vand.u32 %v43, 2139095040
    %v49 = vshrl.u32 %v48, 23
    %v50 = vsub.s32 %v49, 127
    %v51 = vand.u32 2147483647, %v43
    %v52 = vand.u32 %v51, 8388607
    %v53 = vor.u32 %v52, 8388608
    %v54 = vsub.s32 0, %v53
    %v55 = vadd.s32 %v50, 1
    %vm56 = vcmp.gt.s32.totalorder %v55, 0
    %v57 = vsel %vm56, %v55, 0
    %v58 = vshrl.u32 %v57, 5
    %v59 = vand.u32 %v57, 31
    %v60 = vsub.s32 32, %v59
    %v61 = vshrl.u32 683565275, %v60
    %v62 = vshll.u32 683565275, %v59
    %v63 = vshrl.u32 2475754826, %v60
    %v64 = vor.u32 %v62, %v63
    %v65 = vshll.u32 2475754826, %v59
    %v66 = vshrl.u32 2131351028, %v60
    %v67 = vor.u32 %v65, %v66
    %v68 = vshll.u32 2131351028, %v59
    %v69 = vshrl.u32 2102212464, %v60
    %v70 = vor.u32 %v68, %v69
    %v71 = vshll.u32 2102212464, %v59
    %v72 = vshrl.u32 920167782, %v60
    %v73 = vor.u32 %v71, %v72
    %v74 = vshll.u32 920167782, %v59
    %v75 = vshrl.u32 1326507024, %v60
    %v76 = vor.u32 %v74, %v75
    %vm77 = vcmp.lt.s32.totalorder %v58, 1
    %vm78 = vcmp.lt.s32.totalorder %v58, 2
    %vm79 = vcmp.lt.s32.totalorder %v58, 3
    %vm80 = vcmp.lt.s32.totalorder %v58, 4
    %v81 = vsel %vm77, %v61, %v64
    %v82 = vsel %vm80, %v70, 2102212464
    %v83 = vsel %vm79, %v67, %v82
    %v84 = vsel %vm78, %v81, %v83
    %v85 = vsel %vm77, %v64, %v67
    %v86 = vsel %vm80, %v73, 920167782
    %v87 = vsel %vm79, %v70, %v86
    %v88 = vsel %vm78, %v85, %v87
    %v89 = vsel %vm77, %v67, %v70
    %v90 = vsel %vm80, %v76, 1326507024
    %v91 = vsel %vm79, %v73, %v90
    %v92 = vsel %vm78, %v89, %v91
    %v93 = vshll.u32 %v53, 8
    %v94 = vmul.u32.u64.compose %v93, %v92
    %v95 = vextract.low.u32 %v94
    %v96 = vextract.high.u32 %v94
    %v97 = vmul.u32.u64.compose %v93, %v88
    %v98 = vextract.low.u32 %v97
    %v99 = vextract.high.u32 %v97
    %v100 = vmul.u32 %v93, %v84
    %v101 = vadd.s32 %v96, %v98
    %vm102 = vc.u32 %v96, %v98
    %v103 = vadd.s32 %v99, 1
    %v104 = vsel %vm102, %v103, %v99
    %v105 = vadd.s32 %v100, %v104
    %v106 = vadd.s32 %v105, 536870912
    %v107 = vshrl.u32 %v106, 30
    %v108 = vshll.u32 %v107, 30
    %v109 = vsub.s32 %v105, %v108
    %vm110 = vcmp.lt.s32.totalorder %v109, 0
    %v111 = vsub.s32 0, %v109
    %v112 = vsel %vm110, %v111, %v109
    %v113 = vclz %v112
    %v114 = vsub.s32 %v113, 2
    %vm115 = vcmp.gt.s32.totalorder 0, %v114
    %v116 = vsel %vm115, 0, %v114
    %v117 = vsub.s32 32, %v116
    %v118 = vshll.u32 %v109, %v116
    %v119 = vshrl.u32 %v101, %v117
    %v120 = vor.u32 %v118, %v119
    %v121 = vsub.s32 4294967266, %v116
    %v122 = vadd.s32 %v121, 127
    %v123 = vshll.u32 %v122, 23
    %v124 = vor.u32 4788187, %v123
    %v125 = vand.u32 2147483647, %v124
    %v127 = vcvt.s32.f32 %v120
    %v128 = vmul.f32 %v127, %v125
    %v129 = vxor.u32 %v128, 2147483648
    %v130 = vsel %vm47, %v129, %v128
    %v131 = vsub.s32 4, %v107
    %v132 = vsel %vm47, %v131, %v107
    %v133 = vsel %vm46, %v43, %v130
    %v134 = vsel %vm46, 0, %v132
    %v135 = vcosq.f32.pop %v133
    %v136 = vsinq.f32.pop %v133
    %vm137 = vweird.f32 %v43
    %v138 = vadd.s32 %v134, 3
    %v139 = vand.u32 %v138, 3
    %vm140 = vcmp.lt.s32.totalorder %v139, 2
    %vm141 = vcmp.eq.s32.totalorder %v139, 0
    %v142 = vxor.u32 %v136, 2147483648
    %v143 = vsel %vm141, %v135, %v142
    %vm144 = vcmp.eq.s32.totalorder %v139, 2
    %v145 = vxor.u32 %v135, 2147483648
    %v146 = vsel %vm144, %v145, %v136
    %v147 = vsel %vm140, %v143, %v146
    %v148 = vsel %vm137, nan, %v147
    %v149 = vand.u32 2147483647, %v44
    %vm150 = vcmp.le.f32.partialorder %v149, 0.7853982
    %vm151 = vcmp.lt.s32.totalorder %v44, 0
    %v152 = vand.u32 %v44, 2139095040
    %v153 = vshrl.u32 %v152, 23
    %v154 = vsub.s32 %v153, 127
    %v155 = vand.u32 2147483647, %v44
    %v156 = vand.u32 %v155, 8388607
    %v157 = vor.u32 %v156, 8388608
    %v158 = vsub.s32 0, %v157
    %v159 = vadd.s32 %v154, 1
    %vm160 = vcmp.gt.s32.totalorder %v159, 0
    %v161 = vsel %vm160, %v159, 0
    %v162 = vshrl.u32 %v161, 5
    %v163 = vand.u32 %v161, 31
    %v164 = vsub.s32 32, %v163
    %v165 = vshrl.u32 683565275, %v164
    %v166 = vshll.u32 683565275, %v163
    %v167 = vshrl.u32 2475754826, %v164
    %v168 = vor.u32 %v166, %v167
    %v169 = vshll.u32 2475754826, %v163
    %v170 = vshrl.u32 2131351028, %v164
    %v171 = vor.u32 %v169, %v170
    %v172 = vshll.u32 2131351028, %v163
    %v173 = vshrl.u32 2102212464, %v164
    %v174 = vor.u32 %v172, %v173
    %v175 = vshll.u32 2102212464, %v163
    %v176 = vshrl.u32 920167782, %v164
    %v177 = vor.u32 %v175, %v176
    %v178 = vshll.u32 920167782, %v163
    %v179 = vshrl.u32 1326507024, %v164
    %v180 = vor.u32 %v178, %v179
    %vm181 = vcmp.lt.s32.totalorder %v162, 1
    %vm182 = vcmp.lt.s32.totalorder %v162, 2
    %vm183 = vcmp.lt.s32.totalorder %v162, 3
    %vm184 = vcmp.lt.s32.totalorder %v162, 4
    %v185 = vsel %vm181, %v165, %v168
    %v186 = vsel %vm184, %v174, 2102212464
    %v187 = vsel %vm183, %v171, %v186
    %v188 = vsel %vm182, %v185, %v187
    %v189 = vsel %vm181, %v168, %v171
    %v190 = vsel %vm184, %v177, 920167782
    %v191 = vsel %vm183, %v174, %v190
    %v192 = vsel %vm182, %v189, %v191
    %v193 = vsel %vm181, %v171, %v174
    %v194 = vsel %vm184, %v180, 1326507024
    %v195 = vsel %vm183, %v177, %v194
    %v196 = vsel %vm182, %v193, %v195
    %v197 = vshll.u32 %v157, 8
    %v198 = vmul.u32.u64.compose %v197, %v196
    %v199 = vextract.low.u32 %v198
    %v200 = vextract.high.u32 %v198
    %v201 = vmul.u32.u64.compose %v197, %v192
    %v202 = vextract.low.u32 %v201
    %v203 = vextract.high.u32 %v201
    %v204 = vmul.u32 %v197, %v188
    %v205 = vadd.s32 %v200, %v202
    %vm206 = vc.u32 %v200, %v202
    %v207 = vadd.s32 %v203, 1
    %v208 = vsel %vm206, %v207, %v203
    %v209 = vadd.s32 %v204, %v208
    %v210 = vadd.s32 %v209, 536870912
    %v211 = vshrl.u32 %v210, 30
    %v212 = vshll.u32 %v211, 30
    %v213 = vsub.s32 %v209, %v212
    %vm214 = vcmp.lt.s32.totalorder %v213, 0
    %v215 = vsub.s32 0, %v213
    %v216 = vsel %vm214, %v215, %v213
    %v217 = vclz %v216
    %v218 = vsub.s32 %v217, 2
    %vm219 = vcmp.gt.s32.totalorder 0, %v218
    %v220 = vsel %vm219, 0, %v218
    %v221 = vsub.s32 32, %v220
    %v222 = vshll.u32 %v213, %v220
    %v223 = vshrl.u32 %v205, %v221
    %v224 = vor.u32 %v222, %v223
    %v225 = vsub.s32 4294967266, %v220
    %v226 = vadd.s32 %v225, 127
    %v227 = vshll.u32 %v226, 23
    %v228 = vor.u32 4788187, %v227
    %v229 = vand.u32 2147483647, %v228
    %v231 = vcvt.s32.f32 %v224
    %v232 = vmul.f32 %v231, %v229
    %v233 = vxor.u32 %v232, 2147483648
    %v234 = vsel %vm151, %v233, %v232
    %v235 = vsub.s32 4, %v211
    %v236 = vsel %vm151, %v235, %v211
    %v237 = vsel %vm150, %v44, %v234
    %v238 = vsel %vm150, 0, %v236
    %v239 = vcosq.f32.pop %v237
    %v240 = vsinq.f32.pop %v237
    %vm241 = vweird.f32 %v44
    %v242 = vadd.s32 %v238, 3
    %v243 = vand.u32 %v242, 3
    %vm244 = vcmp.lt.s32.totalorder %v243, 2
    %vm245 = vcmp.eq.s32.totalorder %v243, 0
    %v246 = vxor.u32 %v240, 2147483648
    %v247 = vsel %vm245, %v239, %v246
    %vm248 = vcmp.eq.s32.totalorder %v243, 2
    %v249 = vxor.u32 %v239, 2147483648
    %v250 = vsel %vm248, %v249, %v240
    %v251 = vsel %vm244, %v247, %v250
    %v252 = vsel %vm241, nan, %v251
    %253 = vst [vmem:[#allocation2] sm:$0xff] %v148
    %254 = vst [vmem:[#allocation2 + $0x8] sm:$0xff] %v252
    // Predicated region
    $region14: #{tpu_custom_call.1} parent=1 // pred_check
      _
    $region15: #{tpu_custom_call.1} parent=1 // pred_check_branch
      %256 = sbr.rel (0) target = $region17
    $region16: #{tpu_custom_call.1} parent=1 // pred_region
      %s258 = ssub.s32 256, 256
      %259 = vsyncadd [#allocation3], %s258
      %s260 = sshll.u32 [#allocation2], 4
      %s261 = int_to_ptr.vmem [resolvable:$true] %s260
      %266 = dma.vmem_to_hbm [thread:$0]  %s261, 256, %s3, [#allocation3], 128, 128, 8
    $region17: #{tpu_custom_call.1} parent=1 // pred_fallthru
      _
    // Predicated region
    $region18: #{tpu_custom_call.1} parent=1 // pred_check
      _
    $region19: #{tpu_custom_call.1} parent=1 // pred_check_branch
      %268 = sbr.rel (0) target = $region21
    $region20: #{tpu_custom_call.1} parent=1 // pred_region
      %269 = dma.done [#allocation3], 256
    $region21: #{tpu_custom_call.1} parent=1 // pred_fallthru
      _
    %270 = vsyncpa [#allocation3], 1

</llo_original>
